<compile_context>
chip_gen: v5e
topology: v5e:2x2
jax: 0.10.0
libtpu: 0.0.40
codegen_flags: <defaults>
</compile_context>

<pallas_src>
import jax
import jax.numpy as jnp
from jax.experimental import pallas as pl
from jax.experimental.pallas import tpu as pltpu

# ---- static model configuration (small synthetic sizes) -------------------
BATCH = 8            # samples per forward call (BN stats over this axis)
INPUT_SIZE = 32
MID_SIZE = 32
OUTPUT_SIZE = 8
MID_LAYERS = 3
BN_EPS = 1e-5

assert INPUT_SIZE == MID_SIZE, "weight-slab packing assumes l1 and l2 weights share a shape"


def _mlp_kernel(x_ref, w_ref, v_ref, o_ref):
    """x_ref: (B, IN) f32; w_ref: (3, IN, MID) bf16; v_ref: (5, MID) f32;
    o_ref: (B, MID) f32 (zero-padded past OUTPUT_SIZE, sliced in the wrapper).
    Whole per-call batch in one block => BN stats over the full batch."""
    # Load every operand once; the mid-layer loop unrolls at trace time, so
    # everything it reuses (w2, b2, gamma, beta rows) is hoisted here.
    x = x_ref[...]                    # (B, IN)    f32
    w1 = w_ref[0]                     # (IN, MID)  bf16
    w2 = w_ref[1]                     # (MID, MID) bf16
    w3 = w_ref[2]                     # (MID, MID) bf16, cols >= OUT are zero
    b1 = v_ref[0:1, :]                # (1, MID)   f32  (implicit row broadcast)
    b2 = v_ref[1:2, :]
    b3 = v_ref[2:3, :]                # zero-padded past OUT
    gamma = v_ref[3:4, :]
    beta = v_ref[4:5, :]

    # l1 + ReLU: bf16 operands on the MXU, f32 accumulation, f32 elementwise.
    h = jnp.dot(x.astype(jnp.bfloat16), w1,
                preferred_element_type=jnp.float32) + b1
    h = jnp.maximum(h, 0.0)

    inv_b = jnp.float32(1.0 / BATCH)

    # mid_layers x ( l2 -> BatchNorm1d (train stats, eps=1e-5) -> ReLU )
    for _ in range(MID_LAYERS):       # static unroll
        z = jnp.dot(h.astype(jnp.bfloat16), w2,
                    preferred_element_type=jnp.float32) + b2
        # One-pass stats: two independent XLU reductions, no centered second pass.
        s1 = jnp.sum(z, axis=0, keepdims=True)           # (1, MID)
        s2 = jnp.sum(z * z, axis=0, keepdims=True)       # (1, MID)
        mean = s1 * inv_b
        var = s2 * inv_b - mean * mean                   # biased variance
        # Fold BN affine into per-feature scale/shift on (1, MID) rows.
        scale = gamma * jax.lax.rsqrt(var + BN_EPS)      # EUP rsqrt
        shift = beta - mean * scale
        h = jnp.maximum(z * scale + shift, 0.0)          # single FMA-ish pass on the block

    # l3 + ReLU.  w3 / b3 are zero-padded to MID lanes; padded output columns
    # are relu(0) = 0.  Store the full lane-dense (B, MID) block (unmasked vst);
    # the wrapper slices to (B, OUTPUT_SIZE).
    o = jnp.dot(h.astype(jnp.bfloat16), w3,
                preferred_element_type=jnp.float32) + b3
    o_ref[...] = jnp.maximum(o, 0.0)


def pack_params(params):
    """Consolidate the 8 parameter arrays into two slabs (fewer, larger DMAs):
       w_slab (3, IN, MID) bf16 = [w1 | w2 | w3 zero-padded to MID columns]
       v_slab (5, MID)     f32  = [b1 | b2 | b3 zero-padded | gamma | beta]"""
    w3_pad = jnp.zeros((MID_SIZE, MID_SIZE), jnp.float32).at[:, :OUTPUT_SIZE].set(params["w3"])
    w_slab = jnp.stack([params["w1"], params["w2"], w3_pad]).astype(jnp.bfloat16)
    b3_pad = jnp.zeros((1, MID_SIZE), jnp.float32).at[:, :OUTPUT_SIZE].set(params["b3"])
    v_slab = jnp.concatenate(
        [params["b1"], params["b2"], b3_pad, params["bn_gamma"], params["bn_beta"]], axis=0)
    return w_slab, v_slab


def multilayer_net_forward_batched(x, w_slab, v_slab):
    """x: (N, BATCH, INPUT_SIZE) f32 — N independent forward calls of the module
    in one pallas_call (grid over N; weights stay VMEM-resident).  Each grid
    step sees its whole per-call batch, so BN semantics match the module."""
    n = x.shape[0]
    assert x.shape == (n, BATCH, INPUT_SIZE)

    flops = n * 2 * BATCH * (INPUT_SIZE * MID_SIZE
                             + MID_LAYERS * MID_SIZE * MID_SIZE
                             + MID_SIZE * MID_SIZE)
    bytes_accessed = (x.size * 4 + w_slab.size * 2 + v_slab.size * 4
                      + n * BATCH * MID_SIZE * 4)

    out_padded = pl.pallas_call(
        _mlp_kernel,
        out_shape=jax.ShapeDtypeStruct((n, BATCH, MID_SIZE), jnp.float32),
        grid=(n,),
        in_specs=[
            # per-call batch block; leading axis squeezed out of the kernel view
            pl.BlockSpec((None, BATCH, INPUT_SIZE), lambda i: (i, 0, 0)),
            # weight / bias slabs: constant block index -> resident, DMA'd once
            pl.BlockSpec((3, INPUT_SIZE, MID_SIZE), lambda i: (0, 0, 0)),
            pl.BlockSpec((5, MID_SIZE), lambda i: (0, 0)),
        ],
        out_specs=pl.BlockSpec((None, BATCH, MID_SIZE), lambda i: (i, 0, 0)),
        compiler_params=pltpu.CompilerParams(
            dimension_semantics=("parallel",)),           # 2 TCs on v7x
        cost_estimate=pl.CostEstimate(
            flops=flops,
            transcendentals=n * MID_LAYERS * MID_SIZE,    # rsqrt rows
            bytes_accessed=bytes_accessed),
    )(x, w_slab, v_slab)
    # lane-dense store in-kernel; trim the zero-padded columns here
    return out_padded[:, :, :OUTPUT_SIZE]


def multilayer_net_forward(x, w_slab, v_slab):
    """Single forward call: x (BATCH, INPUT_SIZE) -> (BATCH, OUTPUT_SIZE)."""
    return multilayer_net_forward_batched(x[None], w_slab, v_slab)[0]


def init_params(key):
    """nn.Linear-style init (uniform +-1/sqrt(fan_in)); Linear weights stored
    pre-transposed as (in, out), biases as (1, out); BN gamma=1, beta=0."""
    k1, k2, k3, k4, k5, k6 = jax.random.split(key, 6)

    def lin(kw, kb, fan_in, fan_out):
        bound = 1.0 / jnp.sqrt(fan_in)
        w = jax.random.uniform(kw, (fan_in, fan_out), jnp.float32, -bound, bound)
        b = jax.random.uniform(kb, (1, fan_out), jnp.float32, -bound, bound)
        return w, b

    w1, b1 = lin(k1, k2, INPUT_SIZE, MID_SIZE)
    w2, b2 = lin(k3, k4, MID_SIZE, MID_SIZE)
    w3, b3 = lin(k5, k6, MID_SIZE, OUTPUT_SIZE)
    return {
        "w1": w1, "b1": b1,
        "w2": w2, "b2": b2,
        "w3": w3, "b3": b3,
        "bn_gamma": jnp.ones((1, MID_SIZE), jnp.float32),
        "bn_beta": jnp.zeros((1, MID_SIZE), jnp.float32),
    }
    # TODO(synk): BatchNorm running_mean/running_var EMA buffer updates (a
    # training-mode side effect) are not materialized; the forward output does
    # not depend on them.


def _reference_f32(x, p):
    """Plain f32 forward, semantically identical to the PyTorch module (train mode)."""
    h = jnp.maximum(x @ p["w1"] + p["b1"], 0.0)
    for _ in range(MID_LAYERS):
        z = h @ p["w2"] + p["b2"]
        m = jnp.mean(z, axis=0, keepdims=True)
        v = jnp.mean((z - m) ** 2, axis=0, keepdims=True)
        h = jnp.maximum((z - m) / jnp.sqrt(v + BN_EPS) * p["bn_gamma"] + p["bn_beta"], 0.0)
    return jnp.maximum(h @ p["w3"] + p["b3"], 0.0)


def _reference_kernel_math(x, p):
    """Exactly the kernel's arithmetic recipe (bf16 matmul operands, f32
    accumulation, one-pass variance, folded BN scale/shift) in plain XLA —
    used for a tight implementation check."""
    bf = jnp.bfloat16

    def mm(a, w):
        return jnp.dot(a.astype(bf), w.astype(bf), preferred_element_type=jnp.float32)

    inv_b = jnp.float32(1.0 / BATCH)
    h = jnp.maximum(mm(x, p["w1"]) + p["b1"], 0.0)
    for _ in range(MID_LAYERS):
        z = mm(h, p["w2"]) + p["b2"]
        mean = jnp.sum(z, axis=0, keepdims=True) * inv_b
        var = jnp.sum(z * z, axis=0, keepdims=True) * inv_b - mean * mean
        scale = p["bn_gamma"] * jax.lax.rsqrt(var + BN_EPS)
        shift = p["bn_beta"] - mean * scale
        h = jnp.maximum(z * scale + shift, 0.0)
    return jnp.maximum(mm(h, p["w3"]) + p["b3"], 0.0)


if __name__ == "__main__":
    N_CALLS = 4  # independent forward calls batched into one pallas_call

    key = jax.random.PRNGKey(0)
    kx, kp = jax.random.split(key)
    x = jax.random.normal(kx, (N_CALLS, BATCH, INPUT_SIZE), jnp.float32)
    params = init_params(kp)
    w_slab, v_slab = pack_params(params)

    out = multilayer_net_forward_batched(x, w_slab, v_slab)
    out = jax.block_until_ready(out)
    assert out.shape == (N_CALLS, BATCH, OUTPUT_SIZE)

    # Tight check against a reference using the same precision recipe
    # (bf16 matmul operands, one-pass var, folded BN affine, f32 elsewhere).
    ref_impl = jax.vmap(lambda xi: _reference_kernel_math(xi, params))(x)
    assert jnp.allclose(out, ref_impl, atol=5e-3, rtol=5e-3), \
        float(jnp.max(jnp.abs(out - ref_impl)))

    # Looser semantics check against the full-f32 PyTorch-equivalent forward;
    # bf16 matmul operands loosen the agreement, hence the relaxed tolerance.
    ref_f32 = jax.vmap(lambda xi: _reference_f32(xi, params))(x)
    assert jnp.allclose(out, ref_f32, atol=1e-1, rtol=1e-1), \
        float(jnp.max(jnp.abs(out - ref_f32)))

    # Single-call convenience path matches the batched path.
    one = jax.block_until_ready(multilayer_net_forward(x[0], w_slab, v_slab))
    assert jnp.allclose(one, out[0], atol=1e-6, rtol=1e-6)

    print("KERNEL_OK")
</pallas_src>

<mosaic_0001>
module attributes {stable_mosaic.version = 11 : i64} {
  func.func @_mlp_kernel(%arg0: i32, %arg1: memref<1x8x32xf32, #tpu.memory_space<vmem>>, %arg2: memref<3x32x32xbf16, #tpu.memory_space<vmem>>, %arg3: memref<5x32xf32, #tpu.memory_space<vmem>>, %arg4: memref<1x8x32xf32, #tpu.memory_space<vmem>>) attributes {dimension_semantics = [#tpu.dimension_semantics<parallel>], iteration_bounds = array<i64: 4>, scalar_prefetch = 0 : i64, scratch_operands = 0 : i64, tpu.core_type = #tpu.core_type<tc>, window_params = [{transform_indices = @transform_0, window_bounds = array<i64: 1, 8, 32>}, {pipeline_mode = #tpu.pipeline_mode<synchronous>, transform_indices = @transform_1, window_bounds = array<i64: 3, 32, 32>}, {pipeline_mode = #tpu.pipeline_mode<synchronous>, transform_indices = @transform_2, window_bounds = array<i64: 5, 32>}, {transform_indices = @transform_3, window_bounds = array<i64: 1, 8, 32>}]} {
    %c0 = arith.constant 0 : index
    %c0_0 = arith.constant 0 : index
    %c0_1 = arith.constant 0 : index
    %0 = vector.load %arg1[%c0, %c0_0, %c0_1] : memref<1x8x32xf32, #tpu.memory_space<vmem>>, vector<1x8x32xf32>
    %1 = vector.shape_cast %0 : vector<1x8x32xf32> to vector<8x32xf32>
    %c0_2 = arith.constant 0 : index
    %c0_3 = arith.constant 0 : index
    %c0_4 = arith.constant 0 : index
    %2 = vector.load %arg2[%c0_2, %c0_3, %c0_4] : memref<3x32x32xbf16, #tpu.memory_space<vmem>>, vector<1x32x32xbf16>
    %3 = vector.shape_cast %2 : vector<1x32x32xbf16> to vector<32x32xbf16>
    %c1 = arith.constant 1 : index
    %c0_5 = arith.constant 0 : index
    %c0_6 = arith.constant 0 : index
    %4 = vector.load %arg2[%c1, %c0_5, %c0_6] : memref<3x32x32xbf16, #tpu.memory_space<vmem>>, vector<1x32x32xbf16>
    %5 = vector.shape_cast %4 : vector<1x32x32xbf16> to vector<32x32xbf16>
    %c2 = arith.constant 2 : index
    %c0_7 = arith.constant 0 : index
    %c0_8 = arith.constant 0 : index
    %6 = vector.load %arg2[%c2, %c0_7, %c0_8] : memref<3x32x32xbf16, #tpu.memory_space<vmem>>, vector<1x32x32xbf16>
    %7 = vector.shape_cast %6 : vector<1x32x32xbf16> to vector<32x32xbf16>
    %c0_9 = arith.constant 0 : index
    %c0_10 = arith.constant 0 : index
    %8 = vector.load %arg3[%c0_9, %c0_10] : memref<5x32xf32, #tpu.memory_space<vmem>>, vector<1x32xf32>
    %c1_11 = arith.constant 1 : index
    %c0_12 = arith.constant 0 : index
    %9 = vector.load %arg3[%c1_11, %c0_12] : memref<5x32xf32, #tpu.memory_space<vmem>>, vector<1x32xf32>
    %c2_13 = arith.constant 2 : index
    %c0_14 = arith.constant 0 : index
    %10 = vector.load %arg3[%c2_13, %c0_14] : memref<5x32xf32, #tpu.memory_space<vmem>>, vector<1x32xf32>
    %c3 = arith.constant 3 : index
    %c0_15 = arith.constant 0 : index
    %11 = vector.load %arg3[%c3, %c0_15] : memref<5x32xf32, #tpu.memory_space<vmem>>, vector<1x32xf32>
    %c4 = arith.constant 4 : index
    %c0_16 = arith.constant 0 : index
    %12 = vector.load %arg3[%c4, %c0_16] : memref<5x32xf32, #tpu.memory_space<vmem>>, vector<1x32xf32>
    %13 = arith.truncf %1 : vector<8x32xf32> to vector<8x32xbf16>
    %cst = arith.constant dense<0.000000e+00> : vector<8x32xf32>
    %14 = tpu.matmul %13, %3, %cst {dimension_numbers = #tpu.dot_dimension_numbers<[1], [0], [0], [1], [0, 0, 1, 1], [], []>} : vector<8x32xbf16>, vector<32x32xbf16>, vector<8x32xf32> -> vector<8x32xf32>
    %15 = vector.broadcast %8 : vector<1x32xf32> to vector<8x32xf32>
    %16 = arith.addf %14, %15 : vector<8x32xf32>
    %cst_17 = arith.constant 0.000000e+00 : f32
    %17 = vector.broadcast %cst_17 : f32 to vector<8x32xf32>
    %18 = arith.maximumf %16, %17 : vector<8x32xf32>
    %19 = arith.truncf %18 : vector<8x32xf32> to vector<8x32xbf16>
    %cst_18 = arith.constant dense<0.000000e+00> : vector<8x32xf32>
    %20 = tpu.matmul %19, %5, %cst_18 {dimension_numbers = #tpu.dot_dimension_numbers<[1], [0], [0], [1], [0, 0, 1, 1], [], []>} : vector<8x32xbf16>, vector<32x32xbf16>, vector<8x32xf32> -> vector<8x32xf32>
    %21 = vector.broadcast %9 : vector<1x32xf32> to vector<8x32xf32>
    %22 = arith.addf %20, %21 : vector<8x32xf32>
    %cst_19 = arith.constant dense<0.000000e+00> : vector<32xf32>
    %23 = vector.multi_reduction <add>, %22, %cst_19 [0] : vector<8x32xf32> to vector<32xf32>
    %24 = vector.shape_cast %23 : vector<32xf32> to vector<1x32xf32>
    %25 = arith.mulf %22, %22 : vector<8x32xf32>
    %cst_20 = arith.constant dense<0.000000e+00> : vector<32xf32>
    %26 = vector.multi_reduction <add>, %25, %cst_20 [0] : vector<8x32xf32> to vector<32xf32>
    %27 = vector.shape_cast %26 : vector<32xf32> to vector<1x32xf32>
    %cst_21 = arith.constant 1.250000e-01 : f32
    %28 = vector.broadcast %cst_21 : f32 to vector<1x32xf32>
    %29 = arith.mulf %24, %28 : vector<1x32xf32>
    %cst_22 = arith.constant 1.250000e-01 : f32
    %30 = vector.broadcast %cst_22 : f32 to vector<1x32xf32>
    %31 = arith.mulf %27, %30 : vector<1x32xf32>
    %32 = arith.mulf %29, %29 : vector<1x32xf32>
    %33 = arith.subf %31, %32 : vector<1x32xf32>
    %cst_23 = arith.constant 9.99999974E-6 : f32
    %34 = vector.broadcast %cst_23 : f32 to vector<1x32xf32>
    %35 = arith.addf %33, %34 : vector<1x32xf32>
    %36 = math.rsqrt %35 : vector<1x32xf32>
    %37 = arith.mulf %11, %36 : vector<1x32xf32>
    %38 = arith.mulf %29, %37 : vector<1x32xf32>
    %39 = arith.subf %12, %38 : vector<1x32xf32>
    %40 = vector.broadcast %37 : vector<1x32xf32> to vector<8x32xf32>
    %41 = arith.mulf %22, %40 : vector<8x32xf32>
    %42 = vector.broadcast %39 : vector<1x32xf32> to vector<8x32xf32>
    %43 = arith.addf %41, %42 : vector<8x32xf32>
    %cst_24 = arith.constant 0.000000e+00 : f32
    %44 = vector.broadcast %cst_24 : f32 to vector<8x32xf32>
    %45 = arith.maximumf %43, %44 : vector<8x32xf32>
    %46 = arith.truncf %45 : vector<8x32xf32> to vector<8x32xbf16>
    %cst_25 = arith.constant dense<0.000000e+00> : vector<8x32xf32>
    %47 = tpu.matmul %46, %5, %cst_25 {dimension_numbers = #tpu.dot_dimension_numbers<[1], [0], [0], [1], [0, 0, 1, 1], [], []>} : vector<8x32xbf16>, vector<32x32xbf16>, vector<8x32xf32> -> vector<8x32xf32>
    %48 = vector.broadcast %9 : vector<1x32xf32> to vector<8x32xf32>
    %49 = arith.addf %47, %48 : vector<8x32xf32>
    %cst_26 = arith.constant dense<0.000000e+00> : vector<32xf32>
    %50 = vector.multi_reduction <add>, %49, %cst_26 [0] : vector<8x32xf32> to vector<32xf32>
    %51 = vector.shape_cast %50 : vector<32xf32> to vector<1x32xf32>
    %52 = arith.mulf %49, %49 : vector<8x32xf32>
    %cst_27 = arith.constant dense<0.000000e+00> : vector<32xf32>
    %53 = vector.multi_reduction <add>, %52, %cst_27 [0] : vector<8x32xf32> to vector<32xf32>
    %54 = vector.shape_cast %53 : vector<32xf32> to vector<1x32xf32>
    %cst_28 = arith.constant 1.250000e-01 : f32
    %55 = vector.broadcast %cst_28 : f32 to vector<1x32xf32>
    %56 = arith.mulf %51, %55 : vector<1x32xf32>
    %cst_29 = arith.constant 1.250000e-01 : f32
    %57 = vector.broadcast %cst_29 : f32 to vector<1x32xf32>
    %58 = arith.mulf %54, %57 : vector<1x32xf32>
    %59 = arith.mulf %56, %56 : vector<1x32xf32>
    %60 = arith.subf %58, %59 : vector<1x32xf32>
    %cst_30 = arith.constant 9.99999974E-6 : f32
    %61 = vector.broadcast %cst_30 : f32 to vector<1x32xf32>
    %62 = arith.addf %60, %61 : vector<1x32xf32>
    %63 = math.rsqrt %62 : vector<1x32xf32>
    %64 = arith.mulf %11, %63 : vector<1x32xf32>
    %65 = arith.mulf %56, %64 : vector<1x32xf32>
    %66 = arith.subf %12, %65 : vector<1x32xf32>
    %67 = vector.broadcast %64 : vector<1x32xf32> to vector<8x32xf32>
    %68 = arith.mulf %49, %67 : vector<8x32xf32>
    %69 = vector.broadcast %66 : vector<1x32xf32> to vector<8x32xf32>
    %70 = arith.addf %68, %69 : vector<8x32xf32>
    %cst_31 = arith.constant 0.000000e+00 : f32
    %71 = vector.broadcast %cst_31 : f32 to vector<8x32xf32>
    %72 = arith.maximumf %70, %71 : vector<8x32xf32>
    %73 = arith.truncf %72 : vector<8x32xf32> to vector<8x32xbf16>
    %cst_32 = arith.constant dense<0.000000e+00> : vector<8x32xf32>
    %74 = tpu.matmul %73, %5, %cst_32 {dimension_numbers = #tpu.dot_dimension_numbers<[1], [0], [0], [1], [0, 0, 1, 1], [], []>} : vector<8x32xbf16>, vector<32x32xbf16>, vector<8x32xf32> -> vector<8x32xf32>
    %75 = vector.broadcast %9 : vector<1x32xf32> to vector<8x32xf32>
    %76 = arith.addf %74, %75 : vector<8x32xf32>
    %cst_33 = arith.constant dense<0.000000e+00> : vector<32xf32>
    %77 = vector.multi_reduction <add>, %76, %cst_33 [0] : vector<8x32xf32> to vector<32xf32>
    %78 = vector.shape_cast %77 : vector<32xf32> to vector<1x32xf32>
    %79 = arith.mulf %76, %76 : vector<8x32xf32>
    %cst_34 = arith.constant dense<0.000000e+00> : vector<32xf32>
    %80 = vector.multi_reduction <add>, %79, %cst_34 [0] : vector<8x32xf32> to vector<32xf32>
    %81 = vector.shape_cast %80 : vector<32xf32> to vector<1x32xf32>
    %cst_35 = arith.constant 1.250000e-01 : f32
    %82 = vector.broadcast %cst_35 : f32 to vector<1x32xf32>
    %83 = arith.mulf %78, %82 : vector<1x32xf32>
    %cst_36 = arith.constant 1.250000e-01 : f32
    %84 = vector.broadcast %cst_36 : f32 to vector<1x32xf32>
    %85 = arith.mulf %81, %84 : vector<1x32xf32>
    %86 = arith.mulf %83, %83 : vector<1x32xf32>
    %87 = arith.subf %85, %86 : vector<1x32xf32>
    %cst_37 = arith.constant 9.99999974E-6 : f32
    %88 = vector.broadcast %cst_37 : f32 to vector<1x32xf32>
    %89 = arith.addf %87, %88 : vector<1x32xf32>
    %90 = math.rsqrt %89 : vector<1x32xf32>
    %91 = arith.mulf %11, %90 : vector<1x32xf32>
    %92 = arith.mulf %83, %91 : vector<1x32xf32>
    %93 = arith.subf %12, %92 : vector<1x32xf32>
    %94 = vector.broadcast %91 : vector<1x32xf32> to vector<8x32xf32>
    %95 = arith.mulf %76, %94 : vector<8x32xf32>
    %96 = vector.broadcast %93 : vector<1x32xf32> to vector<8x32xf32>
    %97 = arith.addf %95, %96 : vector<8x32xf32>
    %cst_38 = arith.constant 0.000000e+00 : f32
    %98 = vector.broadcast %cst_38 : f32 to vector<8x32xf32>
    %99 = arith.maximumf %97, %98 : vector<8x32xf32>
    %100 = arith.truncf %99 : vector<8x32xf32> to vector<8x32xbf16>
    %cst_39 = arith.constant dense<0.000000e+00> : vector<8x32xf32>
    %101 = tpu.matmul %100, %7, %cst_39 {dimension_numbers = #tpu.dot_dimension_numbers<[1], [0], [0], [1], [0, 0, 1, 1], [], []>} : vector<8x32xbf16>, vector<32x32xbf16>, vector<8x32xf32> -> vector<8x32xf32>
    %102 = vector.broadcast %10 : vector<1x32xf32> to vector<8x32xf32>
    %103 = arith.addf %101, %102 : vector<8x32xf32>
    %cst_40 = arith.constant 0.000000e+00 : f32
    %104 = vector.broadcast %cst_40 : f32 to vector<8x32xf32>
    %105 = arith.maximumf %103, %104 : vector<8x32xf32>
    %c0_41 = arith.constant 0 : index
    %c0_42 = arith.constant 0 : index
    %c0_43 = arith.constant 0 : index
    %106 = vector.load %arg4[%c0_41, %c0_42, %c0_43] : memref<1x8x32xf32, #tpu.memory_space<vmem>>, vector<1x8x32xf32>
    %107 = vector.shape_cast %106 : vector<1x8x32xf32> to vector<8x32xf32>
    %108 = vector.shape_cast %105 : vector<8x32xf32> to vector<1x8x32xf32>
    tpu.vector_store %arg4[%c0_41, %c0_42, %c0_43], %108 {strides = array<i32>} : memref<1x8x32xf32, #tpu.memory_space<vmem>>, vector<1x8x32xf32>,
    return
  }
  func.func @transform_0(%arg0: i32) -> (i32, i32, i32) {
    %c0_i32 = arith.constant 0 : i32
    %c0_i32_0 = arith.constant 0 : i32
    %c0_i32_1 = arith.constant 0 : i32
    return %arg0, %c0_i32, %c0_i32_0 : i32, i32, i32
  }
  func.func @transform_1(%arg0: i32) -> (i32, i32, i32) {
    %c0_i32 = arith.constant 0 : i32
    %c0_i32_0 = arith.constant 0 : i32
    %c0_i32_1 = arith.constant 0 : i32
    %c0_i32_2 = arith.constant 0 : i32
    return %c0_i32, %c0_i32_0, %c0_i32_1 : i32, i32, i32
  }
  func.func @transform_2(%arg0: i32) -> (i32, i32) {
    %c0_i32 = arith.constant 0 : i32
    %c0_i32_0 = arith.constant 0 : i32
    %c0_i32_1 = arith.constant 0 : i32
    return %c0_i32, %c0_i32_0 : i32, i32
  }
  func.func @transform_3(%arg0: i32) -> (i32, i32, i32) {
    %c0_i32 = arith.constant 0 : i32
    %c0_i32_0 = arith.constant 0 : i32
    %c0_i32_1 = arith.constant 0 : i32
    return %arg0, %c0_i32, %c0_i32_0 : i32, i32, i32
  }
}

</mosaic_0001>

<llo_original>
// kernel: tpu_custom_call.1
$region0: #{tpu_custom_call.1}
  #allocation0 [shape = 'u32[]', space=smem, size = 0x4, offset = 0x4, fixed_abs, tag = 'smem constant byte address 0x4 - core index']
  #allocation1 [shape = 'u32[72,128]{1,0:T(1,128)}', space=vmem, size = 0x9000, scoped, tag = 'internal scratch']
  %s0 = inlined_call_operand.hbm [shape: f32[4,8,32], index: 0, kind: input, shape index: {}]
  %s1 = inlined_call_operand.hbm [shape: bf16[3,32,32], index: 1, kind: input, shape index: {}]
  %s2 = inlined_call_operand.hbm [shape: f32[5,32], index: 2, kind: input, shape index: {}]
  %s3 = inlined_call_operand.hbm [shape: f32[4,8,32], index: 3, kind: output, shape index: {}]
  %s4 = sld [smem:[#allocation0]]
  $region57: #{tpu_custom_call.1} parent=0
    _
  %s6 = ssub.s32 1, %s4
  %s7 = scalar_select 0, %s6, %s4
  $region1: #{tpu_custom_call.1} parent=0
    #allocation2 [shape = 'u8[8192]{0}', space=vmem, size = 0x2000, scoped, tag = 'input window, operand 0']
    #allocation3 [shape = 's32[2]{0}', space=sflag, size = 0x8, scoped, tag = 'scoped memory for tpu_custom_call.1']
    #allocation4 [shape = 's32[2]{0}', space=sflag, size = 0x8, scoped, tag = 'scoped memory for tpu_custom_call.1']
    #allocation5 [shape = 'u8[24576]{0}', space=vmem, size = 0x6000, scoped, tag = 'input window, operand 1, single buffered']
    #allocation6 [shape = 's32[1]{0}', space=sflag, size = 0x4, scoped, tag = 'scoped memory for tpu_custom_call.1']
    #allocation7 [shape = 'u8[4096]{0}', space=vmem, size = 0x1000, scoped, tag = 'input window, operand 2, single buffered']
    #allocation8 [shape = 'u8[8192]{0}', space=vmem, size = 0x2000, scoped, tag = 'output window, operand 0']
    %8 = vsyncpa [#allocation3], 0
    %s9 = scalar_lea.sflag [#allocation3], 1
    %10 = vsyncpa %s9, 0
    %11 = vsyncpa [#allocation6], 0
    %12 = vsyncpa [#allocation4], 0
    %s13 = scalar_lea.sflag [#allocation4], 1
    %14 = vsyncpa %s13, 0
    loop: start=0, step=1, limit=6
    $region2: #{tpu_custom_call.1} parent=1 // loop_pre_header
      _
    $region3: #{tpu_custom_call.1} parent=1 // loop_header
      %s16 = sphi 0, %s20
      %p17 = scmp.ge.s32.totalorder %s16, 6
      %s26 = sphi 0, %s28
      %s29 = sphi 0, %s26
      %s30 = sphi 0, %s29
      %s46 = sphi 0, %s30
      %s50 = sphi 0, %s50
      %s52 = sphi 0, %s50
      %s53 = sphi 0, %s52
      %s67 = sphi 0, %s53
      %s71 = sphi 0, %s71
      %s73 = sphi 0, %s71
      %s74 = sphi 0, %s73
      %s88 = sphi 0, %s74
      %s94 = sphi 0, %s96
      %s97 = sphi 0, %s94
      %s98 = sphi 0, %s97
      %s114 = sphi 0, %s98
    $region4: #{tpu_custom_call.1} parent=1 // loop_header_branch
      %19 = sbr.rel (%p17) target = $region8
    $region5: #{tpu_custom_call.1} parent=1 // loop_body
      %s21 = ssub.s32 %s16, 1
      %s22 = ssub.s32 %s16, 2
      %s23 = sadd.s32 %s16, 1
      %s24 = ssub.s32 %s16, %s23
      %p25 = scmp.eq.s32.totalorder %s24, 0
      %s27 = sadd.s32 %s26, 1
      %s28 = scalar_select %p25, %s26, %s27
      %p31 = pneg %p25
      %p32 = scmp.eq.s32.totalorder %s16, 3
      %p33 = por %p31, %p32
      %p34 = scmp.ne.s32.totalorder %s26, %s29
      %p35 = scmp.eq.s32.totalorder %s16, 0
      %p36 = por %p34, %p35
      %p37 = scmp.ne.s32.totalorder %s26, %s29
      %p38 = scmp.eq.s32.totalorder %s21, 3
      %p39 = por %p37, %p38
      %p40 = scmp.ne.s32.totalorder %s29, %s30
      %p41 = scmp.eq.s32.totalorder %s21, 0
      %p42 = por %p40, %p41
      %p43 = scmp.ne.s32.totalorder %s29, %s30
      %p44 = scmp.eq.s32.totalorder %s22, 3
      %p45 = por %p43, %p44
      %p47 = scmp.ne.s32.totalorder %s30, %s46
      %p48 = scmp.eq.s32.totalorder %s22, 0
      %p49 = por %p47, %p48
      %s51 = sadd.s32 %s50, 1
      %p54 = scmp.eq.s32.totalorder %s16, 3
      %p55 = scmp.ne.s32.totalorder %s50, %s52
      %p56 = scmp.eq.s32.totalorder %s16, 0
      %p57 = por %p55, %p56
      %p58 = scmp.ne.s32.totalorder %s50, %s52
      %p59 = scmp.eq.s32.totalorder %s21, 3
      %p60 = por %p58, %p59
      %p61 = scmp.ne.s32.totalorder %s52, %s53
      %p62 = scmp.eq.s32.totalorder %s21, 0
      %p63 = por %p61, %p62
      %p64 = scmp.ne.s32.totalorder %s52, %s53
      %p65 = scmp.eq.s32.totalorder %s22, 3
      %p66 = por %p64, %p65
      %p68 = scmp.ne.s32.totalorder %s53, %s67
      %p69 = scmp.eq.s32.totalorder %s22, 0
      %p70 = por %p68, %p69
      %s72 = sadd.s32 %s71, 1
      %p75 = scmp.eq.s32.totalorder %s16, 3
      %p76 = scmp.ne.s32.totalorder %s71, %s73
      %p77 = scmp.eq.s32.totalorder %s16, 0
      %p78 = por %p76, %p77
      %p79 = scmp.ne.s32.totalorder %s71, %s73
      %p80 = scmp.eq.s32.totalorder %s21, 3
      %p81 = por %p79, %p80
      %p82 = scmp.ne.s32.totalorder %s73, %s74
      %p83 = scmp.eq.s32.totalorder %s21, 0
      %p84 = por %p82, %p83
      %p85 = scmp.ne.s32.totalorder %s73, %s74
      %p86 = scmp.eq.s32.totalorder %s22, 3
      %p87 = por %p85, %p86
      %p89 = scmp.ne.s32.totalorder %s74, %s88
      %p90 = scmp.eq.s32.totalorder %s22, 0
      %p91 = por %p89, %p90
      %s92 = ssub.s32 %s16, %s23
      %p93 = scmp.eq.s32.totalorder %s92, 0
      %s95 = sadd.s32 %s94, 1
      %s96 = scalar_select %p93, %s94, %s95
      %p99 = pneg %p93
      %p100 = scmp.eq.s32.totalorder %s16, 3
      %p101 = por %p99, %p100
      %p102 = scmp.ne.s32.totalorder %s94, %s97
      %p103 = scmp.eq.s32.totalorder %s16, 0
      %p104 = por %p102, %p103
      %p105 = scmp.ne.s32.totalorder %s94, %s97
      %p106 = scmp.eq.s32.totalorder %s21, 3
      %p107 = por %p105, %p106
      %p108 = scmp.ne.s32.totalorder %s97, %s98
      %p109 = scmp.eq.s32.totalorder %s21, 0
      %p110 = por %p108, %p109
      %p111 = scmp.ne.s32.totalorder %s97, %s98
      %p112 = scmp.eq.s32.totalorder %s22, 3
      %p113 = por %p111, %p112
      %p115 = scmp.ne.s32.totalorder %s98, %s114
      %p116 = scmp.eq.s32.totalorder %s22, 0
      %p117 = por %p115, %p116
      %p118 = scmp.le.s32.totalorder 1, %s16
      %p119 = scmp.lt.s32.totalorder %s16, 5
      %p120 = pnand %p118, %p119
      %p121 = pneg %p120
      // Predicated region
      $region9: #{tpu_custom_call.1} parent=5 // pred_check
        _
      $region10: #{tpu_custom_call.1} parent=5 // pred_check_branch
        %123 = sbr.rel (%p120) target = $region12
      $region11: #{tpu_custom_call.1} parent=5 // pred_region
        %s124 = ssub.s32 %s16, 1
        // Predicated region
        $region13: #{tpu_custom_call.1} parent=11 // pred_check
          %p125 = pneg %p63
        $region14: #{tpu_custom_call.1} parent=11 // pred_check_branch
          %127 = sbr.rel (%p125) target = $region16
        $region15: #{tpu_custom_call.1} parent=11 // pred_region
          %129 = vsyncadd [#allocation6], 0
          %s130 = sshll.u32 %s1, 4
          %s131 = int_to_ptr.hbm [resolvable:$true] %s130
          %s132 = sshll.u32 [#allocation5], 4
          %s133 = int_to_ptr.vmem [resolvable:$true] %s132
          %138 = dma.hbm_to_vmem [thread:$0]  %s131, 768, %s133, [#allocation6], 64, 64, 4
        $region16: #{tpu_custom_call.1} parent=11 // pred_fallthru
          _
        // Predicated region
        $region17: #{tpu_custom_call.1} parent=11 // pred_check
          %p139 = pneg %p84
        $region18: #{tpu_custom_call.1} parent=11 // pred_check_branch
          %141 = sbr.rel (%p139) target = $region20
        $region19: #{tpu_custom_call.1} parent=11 // pred_region
          %143 = vsyncadd [#allocation6], 0
          %s145 = sshll.u32 %s2, 4
          %s146 = int_to_ptr.hbm [resolvable:$true] %s145
          %s147 = sshll.u32 [#allocation7], 4
          %s148 = int_to_ptr.vmem [resolvable:$true] %s147
          %150 = dma.hbm_to_vmem [thread:$0]  %s146, 128, %s148, [#allocation6]
        $region20: #{tpu_custom_call.1} parent=11 // pred_fallthru
          _
      $region12: #{tpu_custom_call.1} parent=5 // pred_fallthru
        _
      %p151 = scmp.lt.s32.totalorder %s16, 4
      // Predicated region
      $region21: #{tpu_custom_call.1} parent=5 // pred_check
        %p152 = pneg %p151
      $region22: #{tpu_custom_call.1} parent=5 // pred_check_branch
        %154 = sbr.rel (%p152) target = $region24
      $region23: #{tpu_custom_call.1} parent=5 // pred_region
        // Predicated region
        $region25: #{tpu_custom_call.1} parent=23 // pred_check
          %p155 = pneg %p36
        $region26: #{tpu_custom_call.1} parent=23 // pred_check_branch
          %157 = sbr.rel (%p155) target = $region28
        $region27: #{tpu_custom_call.1} parent=23 // pred_region
          %s158 = sand.u32 %s26, 1
          %s159 = scalar_lea.sflag [#allocation3], %s158
          %s160 = sand.u32 %s26, 1
          %s161 = smul.addr %s160, 8
          %s162 = scalar_lea.vmem [#allocation2], %s161
          %164 = vsyncadd %s159, 0
          %s165 = smul.addr %s16, 8
          %s166 = scalar_lea.hbm %s0, %s165
          %s168 = sshll.u32 %s166, 4
          %s169 = int_to_ptr.hbm [resolvable:$true] %s168
          %s170 = sshll.u32 %s162, 4
          %s171 = int_to_ptr.vmem [resolvable:$true] %s170
          %173 = dma.hbm_to_vmem [thread:$0]  %s169, 128, %s171, %s159
        $region28: #{tpu_custom_call.1} parent=23 // pred_fallthru
          _
      $region24: #{tpu_custom_call.1} parent=5 // pred_fallthru
        _
      %p174 = scmp.le.s32.totalorder 1, %s16
      %p175 = scmp.lt.s32.totalorder %s16, 5
      %p176 = pnand %p174, %p175
      %p177 = pneg %p176
      // Predicated region
      $region29: #{tpu_custom_call.1} parent=5 // pred_check
        _
      $region30: #{tpu_custom_call.1} parent=5 // pred_check_branch
        %179 = sbr.rel (%p176) target = $region32
      $region31: #{tpu_custom_call.1} parent=5 // pred_region
        %s180 = ssub.s32 %s16, 1
        %s181 = sand.u32 %s29, 1
        %s182 = scalar_lea.sflag [#allocation3], %s181
        %s183 = sand.u32 %s29, 1
        %s184 = smul.addr %s183, 8
        %s185 = scalar_lea.vmem [#allocation2], %s184
        // Predicated region
        $region33: #{tpu_custom_call.1} parent=31 // pred_check
          %p186 = pneg %p42
        $region34: #{tpu_custom_call.1} parent=31 // pred_check_branch
          %188 = sbr.rel (%p186) target = $region36
        $region35: #{tpu_custom_call.1} parent=31 // pred_region
          %190 = dma.done %s182, 128
        $region36: #{tpu_custom_call.1} parent=31 // pred_fallthru
          _
        // Predicated region
        $region37: #{tpu_custom_call.1} parent=31 // pred_check
          %p191 = pneg %p63
        $region38: #{tpu_custom_call.1} parent=31 // pred_check_branch
          %193 = sbr.rel (%p191) target = $region40
        $region39: #{tpu_custom_call.1} parent=31 // pred_region
          %195 = dma.done [#allocation6], 768
        $region40: #{tpu_custom_call.1} parent=31 // pred_fallthru
          _
        // Predicated region
        $region41: #{tpu_custom_call.1} parent=31 // pred_check
          %p196 = pneg %p84
        $region42: #{tpu_custom_call.1} parent=31 // pred_check_branch
          %198 = sbr.rel (%p196) target = $region44
        $region43: #{tpu_custom_call.1} parent=31 // pred_region
          %200 = dma.done [#allocation6], 128
        $region44: #{tpu_custom_call.1} parent=31 // pred_fallthru
          _
        %s201 = sand.u32 %s29, 1
        %s202 = scalar_lea.sflag [#allocation3], %s201
        %s203 = sand.u32 %s29, 1
        %s204 = smul.addr %s203, 8
        %s205 = scalar_lea.vmem [#allocation2], %s204
        %p206 = pneg %p42
        %p207 = pneg %p39
        %p208 = pneg %p63
        %p209 = pneg %p60
        %p210 = pneg %p84
        %p211 = pneg %p81
        %p212 = pneg %p110
        %p213 = pneg %p107
        %s214 = sand.u32 %s97, 1
        %s215 = scalar_lea.sflag [#allocation4], %s214
        %s216 = sand.u32 %s97, 1
        %s217 = smul.addr %s216, 8
        %s218 = scalar_lea.vmem [#allocation8], %s217
        %v220 = vld [vmem:[%s185] sm:$0xff]
        %v221 = vld [vmem:[#allocation5] sm:$0xf]
        %v222 = vld [vmem:[#allocation5 + $0x4] sm:$0xf]
        %v223 = vld [vmem:[#allocation5 + $0x8] sm:$0xf]
        %v224 = vld [vmem:[#allocation5 + $0xc] sm:$0xf]
        %s225 = scalar_lea.vmem [#allocation5], 16
        %v226 = vld [vmem:[%s225] sm:$0xf]
        %v227 = vld [vmem:[%s225 + $0x4] sm:$0xf]
        %v228 = vld [vmem:[%s225 + $0x8] sm:$0xf]
        %v229 = vld [vmem:[%s225 + $0xc] sm:$0xf]
        %s230 = scalar_lea.vmem [#allocation5], 32
        %v231 = vld [vmem:[%s230] sm:$0xf]
        %v232 = vld [vmem:[%s230 + $0x4] sm:$0xf]
        %v233 = vld [vmem:[%s230 + $0x8] sm:$0xf]
        %v234 = vld [vmem:[%s230 + $0xc] sm:$0xf]
        %v235 = vld [vmem:[#allocation7] sm:$0x1]
        %v236 = vld [vmem:[#allocation7 + $0x1] sm:$0x1]
        %v237 = vld [vmem:[#allocation7 + $0x2] sm:$0x1]
        %v238 = vld [vmem:[#allocation7 + $0x3] sm:$0x1]
        %v239 = vld [vmem:[#allocation7 + $0x4] sm:$0x1]
        %v240 = vpack.c.bf16 %v220, %v220
        %v241 = vperm.slane %v235, 0
        %v246 = vunpack.c.l.b16 %v221
        %v247 = vunpack.c.l.b16 %v222
        %v248 = vunpack.c.l.b16 %v223
        %v249 = vunpack.c.l.b16 %v224
        %v250 = vpack.c.b16 %v247, %v246
        %v251 = vpack.c.b16 %v249, %v248
        %vm254 = vcmask 261120
        %v256 = vsel %vm254, %v240, 0
        %258 = vmatpush.bf16.msra.mxu0 0
        %259 = vmatpush.bf16.msra.mxu0 0
        %260 = vmatpush.bf16.msra.mxu0 0
        %261 = vmatpush.bf16.msra.mxu0 0
        %262 = vmatpush.bf16.msra.mxu0 0
        %263 = vmatpush.bf16.msra.mxu0 0
        %264 = vmatpush.bf16.msra.mxu0 %v251
        %265 = vmatpush.bf16.msra.mxu0 %v250
        %266 = vmatmul.bf16.gmra.mxu0 %v256
        %v267 = vpop.f32.mrf.mxu0
        %v268 = vadd.f32 %v241, %v267
        %v269 = vpop.f32.mrf.mxu0
        %270 = vdwg.mxu0
        %v271 = vmax.f32 %v268, 0.0
        %v272 = vpack.c.bf16 %v271, %v271
        %v273 = vperm.slane %v236, 0
        %v278 = vunpack.c.l.b16 %v226
        %v279 = vunpack.c.l.b16 %v227
        %v280 = vunpack.c.l.b16 %v228
        %v281 = vunpack.c.l.b16 %v229
        %v282 = vpack.c.b16 %v279, %v278
        %v283 = vpack.c.b16 %v281, %v280
        %v287 = vsel %vm254, %v272, 0
        %289 = vmatpush.bf16.msra.mxu0 0
        %290 = vmatpush.bf16.msra.mxu0 0
        %291 = vmatpush.bf16.msra.mxu0 0
        %292 = vmatpush.bf16.msra.mxu0 0
        %293 = vmatpush.bf16.msra.mxu0 0
        %294 = vmatpush.bf16.msra.mxu0 0
        %295 = vmatpush.bf16.msra.mxu0 %v283
        %296 = vmatpush.bf16.msra.mxu0 %v282
        %297 = vmatmul.bf16.gmra.mxu0 %v287
        %v298 = vpop.f32.mrf.mxu0
        %v299 = vadd.f32 %v273, %v298
        %v300 = vpop.f32.mrf.mxu0
        %301 = vdwg.mxu0
        %v302 = vsel %vm254, %v299, 0.0
        %v303 = vrot.slane %v302, 4
        %v304 = vadd.f32 %v302, %v303
        %v305 = vrot.slane %v304, 2
        %v306 = vadd.f32 %v304, %v305
        %v307 = vrot.slane %v306, 1
        %v308 = vadd.f32 %v306, %v307
        %v309 = vmul.f32 %v299, %v299
        %v310 = vsel %vm254, %v309, 0.0
        %v311 = vrot.slane %v310, 4
        %v312 = vadd.f32 %v310, %v311
        %v313 = vrot.slane %v312, 2
        %v314 = vadd.f32 %v312, %v313
        %v315 = vrot.slane %v314, 1
        %v316 = vadd.f32 %v314, %v315
        %v317 = vmul.f32 %v308, 0.125
        %v318 = vmul.f32 %v316, 0.125
        %v319 = vmul.f32 %v317, %v317
        %v320 = vsub.f32 %v318, %v319
        %v321 = vadd.f32 %v320, 1e-05
        %v322 = vrsqrt.pop %v321
        %v323 = vmul.f32 %v322, %v321
        %v324 = vmul.f32 %v323, %v322
        %v325 = vmul.f32 0.5, %v324
        %v326 = vsub.f32 1.5, %v325
        %v327 = vmul.f32 %v322, %v326
        %vm328 = vweird.f32 %v321
        %vm329 = vweird.f32 %v322
        %vm330 = vmor %vm328, %vm329
        %v331 = vsel %vm330, %v322, %v327
        %v332 = vmul.f32 %v238, %v331
        %v333 = vmul.f32 %v317, %v332
        %v334 = vsub.f32 %v239, %v333
        %v335 = vperm.slane %v332, 0
        %v336 = vmul.f32 %v299, %v335
        %v337 = vperm.slane %v334, 0
        %v338 = vadd.f32 %v336, %v337
        %v339 = vmax.f32 %v338, 0.0
        %v340 = vpack.c.bf16 %v339, %v339
        %v342 = vsel %vm254, %v340, 0
        %344 = vmatpush.bf16.msra.mxu0 0
        %345 = vmatpush.bf16.msra.mxu0 0
        %346 = vmatpush.bf16.msra.mxu0 0
        %347 = vmatpush.bf16.msra.mxu0 0
        %348 = vmatpush.bf16.msra.mxu0 0
        %349 = vmatpush.bf16.msra.mxu0 0
        %350 = vmatpush.bf16.msra.mxu0 %v283
        %351 = vmatpush.bf16.msra.mxu0 %v282
        %352 = vmatmul.bf16.gmra.mxu0 %v342
        %v353 = vpop.f32.mrf.mxu0
        %v354 = vadd.f32 %v273, %v353
        %v355 = vpop.f32.mrf.mxu0
        %356 = vdwg.mxu0
        %v357 = vsel %vm254, %v354, 0.0
        %v358 = vrot.slane %v357, 4
        %v359 = vadd.f32 %v357, %v358
        %v360 = vrot.slane %v359, 2
        %v361 = vadd.f32 %v359, %v360
        %v362 = vrot.slane %v361, 1
        %v363 = vadd.f32 %v361, %v362
        %v364 = vmul.f32 %v354, %v354
        %v365 = vsel %vm254, %v364, 0.0
        %v366 = vrot.slane %v365, 4
        %v367 = vadd.f32 %v365, %v366
        %v368 = vrot.slane %v367, 2
        %v369 = vadd.f32 %v367, %v368
        %v370 = vrot.slane %v369, 1
        %v371 = vadd.f32 %v369, %v370
        %v372 = vmul.f32 %v363, 0.125
        %v373 = vmul.f32 %v371, 0.125
        %v374 = vmul.f32 %v372, %v372
        %v375 = vsub.f32 %v373, %v374
        %v376 = vadd.f32 %v375, 1e-05
        %v377 = vrsqrt.pop %v376
        %v378 = vmul.f32 %v377, %v376
        %v379 = vmul.f32 %v378, %v377
        %v380 = vmul.f32 0.5, %v379
        %v381 = vsub.f32 1.5, %v380
        %v382 = vmul.f32 %v377, %v381
        %vm383 = vweird.f32 %v376
        %vm384 = vweird.f32 %v377
        %vm385 = vmor %vm383, %vm384
        %v386 = vsel %vm385, %v377, %v382
        %v387 = vmul.f32 %v238, %v386
        %v388 = vmul.f32 %v372, %v387
        %v389 = vsub.f32 %v239, %v388
        %v390 = vperm.slane %v387, 0
        %v391 = vmul.f32 %v354, %v390
        %v392 = vperm.slane %v389, 0
        %v393 = vadd.f32 %v391, %v392
        %v394 = vmax.f32 %v393, 0.0
        %v395 = vpack.c.bf16 %v394, %v394
        %v397 = vsel %vm254, %v395, 0
        %399 = vmatpush.bf16.msra.mxu0 0
        %400 = vmatpush.bf16.msra.mxu0 0
        %401 = vmatpush.bf16.msra.mxu0 0
        %402 = vmatpush.bf16.msra.mxu0 0
        %403 = vmatpush.bf16.msra.mxu0 0
        %404 = vmatpush.bf16.msra.mxu0 0
        %405 = vmatpush.bf16.msra.mxu0 %v283
        %406 = vmatpush.bf16.msra.mxu0 %v282
        %407 = vmatmul.bf16.gmra.mxu0 %v397
        %v408 = vpop.f32.mrf.mxu0
        %v409 = vadd.f32 %v273, %v408
        %v410 = vpop.f32.mrf.mxu0
        %411 = vdwg.mxu0
        %v412 = vsel %vm254, %v409, 0.0
        %v413 = vrot.slane %v412, 4
        %v414 = vadd.f32 %v412, %v413
        %v415 = vrot.slane %v414, 2
        %v416 = vadd.f32 %v414, %v415
        %v417 = vrot.slane %v416, 1
        %v418 = vadd.f32 %v416, %v417
        %v419 = vmul.f32 %v409, %v409
        %v420 = vsel %vm254, %v419, 0.0
        %v421 = vrot.slane %v420, 4
        %v422 = vadd.f32 %v420, %v421
        %v423 = vrot.slane %v422, 2
        %v424 = vadd.f32 %v422, %v423
        %v425 = vrot.slane %v424, 1
        %v426 = vadd.f32 %v424, %v425
        %v427 = vmul.f32 %v418, 0.125
        %v428 = vmul.f32 %v426, 0.125
        %v429 = vmul.f32 %v427, %v427
        %v430 = vsub.f32 %v428, %v429
        %v431 = vadd.f32 %v430, 1e-05
        %v432 = vrsqrt.pop %v431
        %v433 = vmul.f32 %v432, %v431
        %v434 = vmul.f32 %v433, %v432
        %v435 = vmul.f32 0.5, %v434
        %v436 = vsub.f32 1.5, %v435
        %v437 = vmul.f32 %v432, %v436
        %vm438 = vweird.f32 %v431
        %vm439 = vweird.f32 %v432
        %vm440 = vmor %vm438, %vm439
        %v441 = vsel %vm440, %v432, %v437
        %v442 = vmul.f32 %v238, %v441
        %v443 = vmul.f32 %v427, %v442
        %v444 = vsub.f32 %v239, %v443
        %v445 = vperm.slane %v442, 0
        %v446 = vmul.f32 %v409, %v445
        %v447 = vperm.slane %v444, 0
        %v448 = vadd.f32 %v446, %v447
        %v449 = vmax.f32 %v448, 0.0
        %v450 = vpack.c.bf16 %v449, %v449
        %v451 = vperm.slane %v237, 0
        %v456 = vunpack.c.l.b16 %v231
        %v457 = vunpack.c.l.b16 %v232
        %v458 = vunpack.c.l.b16 %v233
        %v459 = vunpack.c.l.b16 %v234
        %v460 = vpack.c.b16 %v457, %v456
        %v461 = vpack.c.b16 %v459, %v458
        %v465 = vsel %vm254, %v450, 0
        %467 = vmatpush.bf16.msra.mxu0 0
        %468 = vmatpush.bf16.msra.mxu0 0
        %469 = vmatpush.bf16.msra.mxu0 0
        %470 = vmatpush.bf16.msra.mxu0 0
        %471 = vmatpush.bf16.msra.mxu0 0
        %472 = vmatpush.bf16.msra.mxu0 0
        %473 = vmatpush.bf16.msra.mxu0 %v461
        %474 = vmatpush.bf16.msra.mxu0 %v460
        %475 = vmatmul.bf16.gmra.mxu0 %v465
        %v476 = vpop.f32.mrf.mxu0
        %v477 = vadd.f32 %v451, %v476
        %v478 = vpop.f32.mrf.mxu0
        %479 = vdwg.mxu0
        %v480 = vmax.f32 %v477, 0.0
        %481 = vst.msk [vmem:[%s218] sm:$0xff] %vm254, %v480
        %s482 = sand.u32 %s97, 1
        %s483 = scalar_lea.sflag [#allocation4], %s482
        %s484 = sand.u32 %s97, 1
        %s485 = smul.addr %s484, 8
        %s486 = scalar_lea.vmem [#allocation8], %s485
        // Predicated region
        $region45: #{tpu_custom_call.1} parent=31 // pred_check
          %p487 = pneg %p107
        $region46: #{tpu_custom_call.1} parent=31 // pred_check_branch
          %489 = sbr.rel (%p487) target = $region48
        $region47: #{tpu_custom_call.1} parent=31 // pred_region
          %491 = vsyncadd %s483, 0
          %s492 = smul.addr %s21, 8
          %s493 = scalar_lea.hbm %s3, %s492
          %s495 = sshll.u32 %s486, 4
          %s496 = int_to_ptr.vmem [resolvable:$true] %s495
          %s497 = sshll.u32 %s493, 4
          %s498 = int_to_ptr.hbm [resolvable:$true] %s497
          %500 = dma.vmem_to_hbm [thread:$0]  %s496, 128, %s498, %s483
        $region48: #{tpu_custom_call.1} parent=31 // pred_fallthru
          _
      $region32: #{tpu_custom_call.1} parent=5 // pred_fallthru
        _
      %p501 = scmp.le.s32.totalorder 2, %s16
      // Predicated region
      $region49: #{tpu_custom_call.1} parent=5 // pred_check
        %p502 = pneg %p501
      $region50: #{tpu_custom_call.1} parent=5 // pred_check_branch
        %504 = sbr.rel (%p502) target = $region52
      $region51: #{tpu_custom_call.1} parent=5 // pred_region
        %s505 = ssub.s32 %s16, 2
        // Predicated region
        $region53: #{tpu_custom_call.1} parent=51 // pred_check
          %p506 = pneg %p113
        $region54: #{tpu_custom_call.1} parent=51 // pred_check_branch
          %508 = sbr.rel (%p506) target = $region56
        $region55: #{tpu_custom_call.1} parent=51 // pred_region
          %s509 = sand.u32 %s98, 1
          %s510 = scalar_lea.sflag [#allocation4], %s509
          %s511 = sand.u32 %s98, 1
          %s512 = smul.addr %s511, 8
          %s513 = scalar_lea.vmem [#allocation8], %s512
          %515 = dma.done %s510, 128
        $region56: #{tpu_custom_call.1} parent=51 // pred_fallthru
          _
      $region52: #{tpu_custom_call.1} parent=5 // pred_fallthru
        _
    $region6: #{tpu_custom_call.1} parent=1 // loop_footer
      %s20 = sadd.s32 1, %s16
    $region7: #{tpu_custom_call.1} parent=1 // loop_footer_branch
      %15 = sbr.rel target = $region3
    $region8: #{tpu_custom_call.1} parent=1 // loop_exit
      _
    %516 = vsyncpa [#allocation3], 1
    %s517 = scalar_lea.sflag [#allocation3], 1
    %518 = vsyncpa %s517, 1
    %519 = vsyncpa [#allocation6], 1
    %520 = vsyncpa [#allocation4], 1
    %s521 = scalar_lea.sflag [#allocation4], 1
    %522 = vsyncpa %s521, 1

</llo_original>
